<compile_context>
chip_gen: v7x
topology: tpu7x:2x2x1
jax: 0.10.0
libtpu: 0.0.40
codegen_flags: <defaults>
</compile_context>

<pallas_src>
import math

import jax
import jax.numpy as jnp
from jax.experimental import pallas as pl
from jax.experimental.pallas import tpu as pltpu

LANE = 128      # vreg lane width
SUBLANE = 8     # vreg sublane count (f32)


def _round_up(n, m):
    return ((n + m - 1) // m) * m


def _mlp_kernel(x_ref, w1_ref, w2_ref, w3_ref, w4_ref, w5_ref, b_ref, o_ref):
    """Whole 5-layer forward for one batch tile, fully resident in VMEM.

    x_ref  : (tile_b, in_pad)        bf16
    w*_ref : (din_pad, dout_pad)     bf16   (feature dims padded to multiples of 128)
    b_ref  : (8, max_dout_pad)       f32    row l = bias of layer l (zero padded)
    o_ref  : (tile_b, out_pad)       f32    lane-dense output tile
    """
    h = x_ref[...]                                   # bf16 activations
    weights = (w1_ref, w2_ref, w3_ref, w4_ref, w5_ref)
    n_layers = len(weights)
    for l, w_ref in enumerate(weights):
        dout = w_ref.shape[1]                        # static, multiple of 128
        acc = jnp.dot(h, w_ref[...], preferred_element_type=jnp.float32)
        acc = acc + b_ref[l:l + 1, :dout]            # f32 bias, broadcast over rows
        if l < n_layers - 1:
            # hidden layer: ReLU in f32, back to bf16 for the next MXU pass
            h = jnp.maximum(acc, 0.0).astype(jnp.bfloat16)
        else:
            o_ref[...] = acc.astype(o_ref.dtype)


def mlp_forward(x, params, *, max_tile_b=256):
    """x: (B, in_dim) float32.  params: list of 5 (W, b), W is (in, out), b is (out,).

    Returns (B, out_dim) float32.
    """
    assert len(params) == 5
    B, in_dim = x.shape
    out_dim = params[-1][0].shape[1]

    # ---- batch tiling: one grid step for small batches, MXU-filling tiles for big ones ----
    if B <= max_tile_b:
        tile_b = _round_up(B, SUBLANE)
    else:
        tile_b = max_tile_b
    B_pad = _round_up(B, tile_b)
    grid = (B_pad // tile_b,)

    # ---- pad every feature dim to a multiple of 128 (lane-dense loads/stores) ----
    in_pad = _round_up(in_dim, LANE)
    x_p = jnp.zeros((B_pad, in_pad), jnp.bfloat16).at[:B, :in_dim].set(
        x.astype(jnp.bfloat16))

    w_padded = []
    dout_pads = []
    d_prev = in_pad
    for (W, b) in params:
        din, dout = W.shape
        din_p, dout_p = _round_up(din, LANE), _round_up(dout, LANE)
        assert din_p == d_prev, "layer input width must match previous layer output"
        Wp = jnp.zeros((din_p, dout_p), jnp.bfloat16).at[:din, :dout].set(
            W.astype(jnp.bfloat16))
        w_padded.append(Wp)
        dout_pads.append(dout_p)
        d_prev = dout_p
    out_pad = dout_pads[-1]

    # ---- all 5 biases stacked into a single f32 array -> one DMA instead of five ----
    max_pad = max(dout_pads)
    b_stack = jnp.zeros((SUBLANE, max_pad), jnp.float32)
    for l, (W, b) in enumerate(params):
        b_stack = b_stack.at[l, :b.shape[-1]].set(b.reshape(-1).astype(jnp.float32))

    in_specs = [pl.BlockSpec((tile_b, in_pad), lambda i: (i, 0))]
    for Wp in w_padded:
        in_specs.append(pl.BlockSpec(Wp.shape, lambda i: (0, 0)))      # weight resident
    in_specs.append(pl.BlockSpec(b_stack.shape, lambda i: (0, 0)))     # stacked biases
    out_spec = pl.BlockSpec((tile_b, out_pad), lambda i: (i, 0))

    fn = pl.pallas_call(
        _mlp_kernel,
        out_shape=jax.ShapeDtypeStruct((B_pad, out_pad), jnp.float32),
        grid_spec=pltpu.PrefetchScalarGridSpec(
            num_scalar_prefetch=0,
            grid=grid,
            in_specs=in_specs,
            out_specs=out_spec,
        ),
        compiler_params=pltpu.CompilerParams(
            # Only shard across cores when there are >= 2 real tiles of work.
            dimension_semantics=("parallel",) if grid[0] > 1 else ("arbitrary",),
        ),
    )
    out = fn(x_p, *w_padded, b_stack)
    return out[:B, :out_dim]


def init_linear(key, in_dim, out_dim):
    """Mimic PyTorch nn.Linear default init: uniform(-1/sqrt(in), 1/sqrt(in))."""
    kw, kb = jax.random.split(key)
    bound = 1.0 / math.sqrt(in_dim)
    W = jax.random.uniform(kw, (in_dim, out_dim), jnp.float32, -bound, bound)
    b = jax.random.uniform(kb, (out_dim,), jnp.float32, -bound, bound)
    return W, b


def reference_forward(x, params):
    """Pure-JAX reference with the same bf16-weight / f32-accumulate recipe."""
    h = x.astype(jnp.bfloat16)
    n = len(params)
    for l, (W, b) in enumerate(params):
        acc = jnp.dot(h, W.astype(jnp.bfloat16),
                      preferred_element_type=jnp.float32) + b.astype(jnp.float32)
        if l < n - 1:
            h = jnp.maximum(acc, 0.0).astype(jnp.bfloat16)
        else:
            h = acc
    return h


if __name__ == "__main__":
    # Small shapes consistent with the module's constructor:
    # in_dim=32, h1=64, h2=64, h3=32, h4=32, out_dim=8, batch=16.
    in_dim, h1, h2, h3, h4, out_dim = 32, 64, 64, 32, 32, 8
    batch = 16

    key = jax.random.PRNGKey(0)
    kx, k1, k2, k3, k4, k5 = jax.random.split(key, 6)

    x = jax.random.normal(kx, (batch, in_dim), jnp.float32)

    params = [
        init_linear(k1, in_dim, h1),
        init_linear(k2, h1, h2),
        init_linear(k3, h2, h3),
        init_linear(k4, h3, h4),
        init_linear(k5, h4, out_dim),
    ]

    out = mlp_forward(x, params)
    out = jax.block_until_ready(out)

    ref = reference_forward(x, params)
    assert out.shape == (batch, out_dim), f"bad output shape {out.shape}"
    assert jnp.allclose(out, ref, atol=2e-3, rtol=2e-3), "mismatch vs reference"

    print("KERNEL_OK")
</pallas_src>

<mosaic_0001>
module attributes {stable_mosaic.version = 11 : i64} {
  func.func @_mlp_kernel(%arg0: i32, %arg1: memref<16x128xbf16, #tpu.memory_space<vmem>>, %arg2: memref<128x128xbf16, #tpu.memory_space<vmem>>, %arg3: memref<128x128xbf16, #tpu.memory_space<vmem>>, %arg4: memref<128x128xbf16, #tpu.memory_space<vmem>>, %arg5: memref<128x128xbf16, #tpu.memory_space<vmem>>, %arg6: memref<128x128xbf16, #tpu.memory_space<vmem>>, %arg7: memref<8x128xf32, #tpu.memory_space<vmem>>, %arg8: memref<16x128xf32, #tpu.memory_space<vmem>>) attributes {dimension_semantics = [#tpu.dimension_semantics<arbitrary>], iteration_bounds = array<i64: 1>, scalar_prefetch = 0 : i64, scratch_operands = 0 : i64, tpu.core_type = #tpu.core_type<tc>, window_params = [{transform_indices = @transform_0, window_bounds = array<i64: 16, 128>}, {pipeline_mode = #tpu.pipeline_mode<synchronous>, transform_indices = @transform_1, window_bounds = array<i64: 128, 128>}, {pipeline_mode = #tpu.pipeline_mode<synchronous>, transform_indices = @transform_2, window_bounds = array<i64: 128, 128>}, {pipeline_mode = #tpu.pipeline_mode<synchronous>, transform_indices = @transform_3, window_bounds = array<i64: 128, 128>}, {pipeline_mode = #tpu.pipeline_mode<synchronous>, transform_indices = @transform_4, window_bounds = array<i64: 128, 128>}, {pipeline_mode = #tpu.pipeline_mode<synchronous>, transform_indices = @transform_5, window_bounds = array<i64: 128, 128>}, {pipeline_mode = #tpu.pipeline_mode<synchronous>, transform_indices = @transform_6, window_bounds = array<i64: 8, 128>}, {transform_indices = @transform_7, window_bounds = array<i64: 16, 128>}]} {
    %c0 = arith.constant 0 : index
    %c0_0 = arith.constant 0 : index
    %0 = vector.load %arg1[%c0, %c0_0] : memref<16x128xbf16, #tpu.memory_space<vmem>>, vector<16x128xbf16>
    %c0_1 = arith.constant 0 : index
    %c0_2 = arith.constant 0 : index
    %1 = vector.load %arg2[%c0_1, %c0_2] : memref<128x128xbf16, #tpu.memory_space<vmem>>, vector<128x128xbf16>
    %cst = arith.constant dense<0.000000e+00> : vector<16x128xf32>
    %2 = tpu.matmul %0, %1, %cst {dimension_numbers = #tpu.dot_dimension_numbers<[1], [0], [0], [1], [0, 0, 1, 1], [], []>} : vector<16x128xbf16>, vector<128x128xbf16>, vector<16x128xf32> -> vector<16x128xf32>
    %c0_3 = arith.constant 0 : index
    %c0_4 = arith.constant 0 : index
    %3 = vector.load %arg7[%c0_3, %c0_4] : memref<8x128xf32, #tpu.memory_space<vmem>>, vector<1x128xf32>
    %4 = vector.broadcast %3 : vector<1x128xf32> to vector<16x128xf32>
    %5 = arith.addf %2, %4 : vector<16x128xf32>
    %cst_5 = arith.constant 0.000000e+00 : f32
    %6 = vector.broadcast %cst_5 : f32 to vector<16x128xf32>
    %7 = arith.maximumf %5, %6 : vector<16x128xf32>
    %8 = arith.truncf %7 : vector<16x128xf32> to vector<16x128xbf16>
    %c0_6 = arith.constant 0 : index
    %c0_7 = arith.constant 0 : index
    %9 = vector.load %arg3[%c0_6, %c0_7] : memref<128x128xbf16, #tpu.memory_space<vmem>>, vector<128x128xbf16>
    %cst_8 = arith.constant dense<0.000000e+00> : vector<16x128xf32>
    %10 = tpu.matmul %8, %9, %cst_8 {dimension_numbers = #tpu.dot_dimension_numbers<[1], [0], [0], [1], [0, 0, 1, 1], [], []>} : vector<16x128xbf16>, vector<128x128xbf16>, vector<16x128xf32> -> vector<16x128xf32>
    %c1 = arith.constant 1 : index
    %c0_9 = arith.constant 0 : index
    %11 = vector.load %arg7[%c1, %c0_9] : memref<8x128xf32, #tpu.memory_space<vmem>>, vector<1x128xf32>
    %12 = vector.broadcast %11 : vector<1x128xf32> to vector<16x128xf32>
    %13 = arith.addf %10, %12 : vector<16x128xf32>
    %cst_10 = arith.constant 0.000000e+00 : f32
    %14 = vector.broadcast %cst_10 : f32 to vector<16x128xf32>
    %15 = arith.maximumf %13, %14 : vector<16x128xf32>
    %16 = arith.truncf %15 : vector<16x128xf32> to vector<16x128xbf16>
    %c0_11 = arith.constant 0 : index
    %c0_12 = arith.constant 0 : index
    %17 = vector.load %arg4[%c0_11, %c0_12] : memref<128x128xbf16, #tpu.memory_space<vmem>>, vector<128x128xbf16>
    %cst_13 = arith.constant dense<0.000000e+00> : vector<16x128xf32>
    %18 = tpu.matmul %16, %17, %cst_13 {dimension_numbers = #tpu.dot_dimension_numbers<[1], [0], [0], [1], [0, 0, 1, 1], [], []>} : vector<16x128xbf16>, vector<128x128xbf16>, vector<16x128xf32> -> vector<16x128xf32>
    %c2 = arith.constant 2 : index
    %c0_14 = arith.constant 0 : index
    %19 = vector.load %arg7[%c2, %c0_14] : memref<8x128xf32, #tpu.memory_space<vmem>>, vector<1x128xf32>
    %20 = vector.broadcast %19 : vector<1x128xf32> to vector<16x128xf32>
    %21 = arith.addf %18, %20 : vector<16x128xf32>
    %cst_15 = arith.constant 0.000000e+00 : f32
    %22 = vector.broadcast %cst_15 : f32 to vector<16x128xf32>
    %23 = arith.maximumf %21, %22 : vector<16x128xf32>
    %24 = arith.truncf %23 : vector<16x128xf32> to vector<16x128xbf16>
    %c0_16 = arith.constant 0 : index
    %c0_17 = arith.constant 0 : index
    %25 = vector.load %arg5[%c0_16, %c0_17] : memref<128x128xbf16, #tpu.memory_space<vmem>>, vector<128x128xbf16>
    %cst_18 = arith.constant dense<0.000000e+00> : vector<16x128xf32>
    %26 = tpu.matmul %24, %25, %cst_18 {dimension_numbers = #tpu.dot_dimension_numbers<[1], [0], [0], [1], [0, 0, 1, 1], [], []>} : vector<16x128xbf16>, vector<128x128xbf16>, vector<16x128xf32> -> vector<16x128xf32>
    %c3 = arith.constant 3 : index
    %c0_19 = arith.constant 0 : index
    %27 = vector.load %arg7[%c3, %c0_19] : memref<8x128xf32, #tpu.memory_space<vmem>>, vector<1x128xf32>
    %28 = vector.broadcast %27 : vector<1x128xf32> to vector<16x128xf32>
    %29 = arith.addf %26, %28 : vector<16x128xf32>
    %cst_20 = arith.constant 0.000000e+00 : f32
    %30 = vector.broadcast %cst_20 : f32 to vector<16x128xf32>
    %31 = arith.maximumf %29, %30 : vector<16x128xf32>
    %32 = arith.truncf %31 : vector<16x128xf32> to vector<16x128xbf16>
    %c0_21 = arith.constant 0 : index
    %c0_22 = arith.constant 0 : index
    %33 = vector.load %arg6[%c0_21, %c0_22] : memref<128x128xbf16, #tpu.memory_space<vmem>>, vector<128x128xbf16>
    %cst_23 = arith.constant dense<0.000000e+00> : vector<16x128xf32>
    %34 = tpu.matmul %32, %33, %cst_23 {dimension_numbers = #tpu.dot_dimension_numbers<[1], [0], [0], [1], [0, 0, 1, 1], [], []>} : vector<16x128xbf16>, vector<128x128xbf16>, vector<16x128xf32> -> vector<16x128xf32>
    %c4 = arith.constant 4 : index
    %c0_24 = arith.constant 0 : index
    %35 = vector.load %arg7[%c4, %c0_24] : memref<8x128xf32, #tpu.memory_space<vmem>>, vector<1x128xf32>
    %36 = vector.broadcast %35 : vector<1x128xf32> to vector<16x128xf32>
    %37 = arith.addf %34, %36 : vector<16x128xf32>
    %c0_25 = arith.constant 0 : index
    %c0_26 = arith.constant 0 : index
    %38 = vector.load %arg8[%c0_25, %c0_26] : memref<16x128xf32, #tpu.memory_space<vmem>>, vector<16x128xf32>
    tpu.vector_store %arg8[%c0_25, %c0_26], %37 {strides = array<i32>} : memref<16x128xf32, #tpu.memory_space<vmem>>, vector<16x128xf32>,
    return
  }
  func.func @transform_0(%arg0: i32) -> (i32, i32) {
    %c0_i32 = arith.constant 0 : i32
    %c0_i32_0 = arith.constant 0 : i32
    return %arg0, %c0_i32 : i32, i32
  }
  func.func @transform_1(%arg0: i32) -> (i32, i32) {
    %c0_i32 = arith.constant 0 : i32
    %c0_i32_0 = arith.constant 0 : i32
    %c0_i32_1 = arith.constant 0 : i32
    return %c0_i32, %c0_i32_0 : i32, i32
  }
  func.func @transform_2(%arg0: i32) -> (i32, i32) {
    %c0_i32 = arith.constant 0 : i32
    %c0_i32_0 = arith.constant 0 : i32
    %c0_i32_1 = arith.constant 0 : i32
    return %c0_i32, %c0_i32_0 : i32, i32
  }
  func.func @transform_3(%arg0: i32) -> (i32, i32) {
    %c0_i32 = arith.constant 0 : i32
    %c0_i32_0 = arith.constant 0 : i32
    %c0_i32_1 = arith.constant 0 : i32
    return %c0_i32, %c0_i32_0 : i32, i32
  }
  func.func @transform_4(%arg0: i32) -> (i32, i32) {
    %c0_i32 = arith.constant 0 : i32
    %c0_i32_0 = arith.constant 0 : i32
    %c0_i32_1 = arith.constant 0 : i32
    return %c0_i32, %c0_i32_0 : i32, i32
  }
  func.func @transform_5(%arg0: i32) -> (i32, i32) {
    %c0_i32 = arith.constant 0 : i32
    %c0_i32_0 = arith.constant 0 : i32
    %c0_i32_1 = arith.constant 0 : i32
    return %c0_i32, %c0_i32_0 : i32, i32
  }
  func.func @transform_6(%arg0: i32) -> (i32, i32) {
    %c0_i32 = arith.constant 0 : i32
    %c0_i32_0 = arith.constant 0 : i32
    %c0_i32_1 = arith.constant 0 : i32
    return %c0_i32, %c0_i32_0 : i32, i32
  }
  func.func @transform_7(%arg0: i32) -> (i32, i32) {
    %c0_i32 = arith.constant 0 : i32
    %c0_i32_0 = arith.constant 0 : i32
    return %arg0, %c0_i32 : i32, i32
  }
}

</mosaic_0001>

<llo_original>
// kernel: tpu_custom_call.1
$region0: #{tpu_custom_call.1}
  #allocation0 [shape = 'u32[]', space=smem, size = 0x4, offset = 0x4, fixed_abs, tag = 'smem constant byte address 0x4 - core index']
  #allocation1 [shape = 'u32[144,128]{1,0:T(1,128)}', space=vmem, size = 0x12000, scoped, tag = 'internal scratch']
  %s0 = inlined_call_operand.hbm [shape: bf16[16,128], index: 0, kind: input, shape index: {}]
  %s1 = inlined_call_operand.hbm [shape: bf16[128,128], index: 1, kind: input, shape index: {}]
  %s2 = inlined_call_operand.hbm [shape: bf16[128,128], index: 2, kind: input, shape index: {}]
  %s3 = inlined_call_operand.hbm [shape: bf16[128,128], index: 3, kind: input, shape index: {}]
  %s4 = inlined_call_operand.hbm [shape: bf16[128,128], index: 4, kind: input, shape index: {}]
  %s5 = inlined_call_operand.hbm [shape: bf16[128,128], index: 5, kind: input, shape index: {}]
  %s6 = inlined_call_operand.vmem [shape: f32[8,128], index: 6, kind: input, shape index: {}]
  %s7 = inlined_call_operand.hbm [shape: f32[16,128], index: 7, kind: output, shape index: {}]
  %s8 = sld [smem:[#allocation0]]
  $region62: #{tpu_custom_call.1} parent=0
    _
  %s10 = ssub.s32 1, %s8
  %s11 = scalar_select 0, %s10, %s8
  $region1: #{tpu_custom_call.1} parent=0
    #allocation2 [shape = 'u8[4096]{0}', space=vmem, size = 0x1000, scoped, tag = 'input window, operand 0, single buffered']
    #allocation3 [shape = 's32[1]{0}', space=sflag, size = 0x4, scoped, tag = 'scoped memory for tpu_custom_call.1']
    #allocation4 [shape = 's32[1]{0}', space=sflag, size = 0x4, scoped, tag = 'scoped memory for tpu_custom_call.1']
    #allocation5 [shape = 'u8[32768]{0}', space=vmem, size = 0x8000, scoped, tag = 'input window, operand 1, single buffered']
    #allocation6 [shape = 's32[1]{0}', space=sflag, size = 0x4, scoped, tag = 'scoped memory for tpu_custom_call.1']
    #allocation7 [shape = 'u8[32768]{0}', space=vmem, size = 0x8000, scoped, tag = 'input window, operand 2, single buffered']
    #allocation8 [shape = 'u8[32768]{0}', space=vmem, size = 0x8000, scoped, tag = 'input window, operand 3, single buffered']
    #allocation9 [shape = 's32[1]{0}', space=sflag, size = 0x4, scoped, tag = 'scoped memory for tpu_custom_call.1']
    #allocation10 [shape = 'u8[32768]{0}', space=vmem, size = 0x8000, scoped, tag = 'input window, operand 4, single buffered']
    #allocation11 [shape = 'u8[32768]{0}', space=vmem, size = 0x8000, scoped, tag = 'input window, operand 5, single buffered']
    #allocation12 [shape = 's32[1]{0}', space=sflag, size = 0x4, scoped, tag = 'scoped memory for tpu_custom_call.1']
    #allocation13 [shape = 'u8[8192]{0}', space=vmem, size = 0x2000, scoped, tag = 'output window, operand 0, single buffered']
    %12 = vsyncpa [#allocation3], 0
    %13 = vsyncpa [#allocation6], 0
    %14 = vsyncpa [#allocation9], 0
    %15 = vsyncpa [#allocation12], 0
    %16 = vsyncpa [#allocation4], 0
    // Predicated region
    $region2: #{tpu_custom_call.1} parent=1 // pred_check
      _
    $region3: #{tpu_custom_call.1} parent=1 // pred_check_branch
      %18 = sbr.rel (0) target = $region5
    $region4: #{tpu_custom_call.1} parent=1 // pred_region
      %s20 = ssub.s32 128, 128
      %21 = vsyncadd [#allocation3], %s20
      %s22 = sshll.u32 [#allocation2], 4
      %s23 = int_to_ptr.vmem [resolvable:$true] %s22
      %28 = dma.hbm_to_vmem [thread:$0]  %s0, 128, %s23, [#allocation3], 64, 64, 4
    $region5: #{tpu_custom_call.1} parent=1 // pred_fallthru
      _
    // Predicated region
    $region6: #{tpu_custom_call.1} parent=1 // pred_check
      _
    $region7: #{tpu_custom_call.1} parent=1 // pred_check_branch
      %30 = sbr.rel (0) target = $region9
    $region8: #{tpu_custom_call.1} parent=1 // pred_region
      %s32 = ssub.s32 1024, 1024
      %33 = vsyncadd [#allocation6], %s32
      %s34 = sshll.u32 [#allocation5], 4
      %s35 = int_to_ptr.vmem [resolvable:$true] %s34
      %40 = dma.hbm_to_vmem [thread:$0]  %s1, 1024, %s35, [#allocation6], 64, 64, 4
    $region9: #{tpu_custom_call.1} parent=1 // pred_fallthru
      _
    // Predicated region
    $region10: #{tpu_custom_call.1} parent=1 // pred_check
      _
    $region11: #{tpu_custom_call.1} parent=1 // pred_check_branch
      %42 = sbr.rel (0) target = $region13
    $region12: #{tpu_custom_call.1} parent=1 // pred_region
      %s44 = ssub.s32 1024, 1024
      %45 = vsyncadd [#allocation6], %s44
      %s46 = sshll.u32 [#allocation7], 4
      %s47 = int_to_ptr.vmem [resolvable:$true] %s46
      %52 = dma.hbm_to_vmem [thread:$0]  %s2, 1024, %s47, [#allocation6], 64, 64, 4
    $region13: #{tpu_custom_call.1} parent=1 // pred_fallthru
      _
    // Predicated region
    $region14: #{tpu_custom_call.1} parent=1 // pred_check
      _
    $region15: #{tpu_custom_call.1} parent=1 // pred_check_branch
      %54 = sbr.rel (0) target = $region17
    $region16: #{tpu_custom_call.1} parent=1 // pred_region
      %s56 = ssub.s32 1024, 1024
      %57 = vsyncadd [#allocation9], %s56
      %s58 = sshll.u32 [#allocation8], 4
      %s59 = int_to_ptr.vmem [resolvable:$true] %s58
      %64 = dma.hbm_to_vmem [thread:$0]  %s3, 1024, %s59, [#allocation9], 64, 64, 4
    $region17: #{tpu_custom_call.1} parent=1 // pred_fallthru
      _
    // Predicated region
    $region18: #{tpu_custom_call.1} parent=1 // pred_check
      _
    $region19: #{tpu_custom_call.1} parent=1 // pred_check_branch
      %66 = sbr.rel (0) target = $region21
    $region20: #{tpu_custom_call.1} parent=1 // pred_region
      %s68 = ssub.s32 1024, 1024
      %69 = vsyncadd [#allocation9], %s68
      %s70 = sshll.u32 [#allocation10], 4
      %s71 = int_to_ptr.vmem [resolvable:$true] %s70
      %76 = dma.hbm_to_vmem [thread:$0]  %s4, 1024, %s71, [#allocation9], 64, 64, 4
    $region21: #{tpu_custom_call.1} parent=1 // pred_fallthru
      _
    // Predicated region
    $region22: #{tpu_custom_call.1} parent=1 // pred_check
      _
    $region23: #{tpu_custom_call.1} parent=1 // pred_check_branch
      %78 = sbr.rel (0) target = $region25
    $region24: #{tpu_custom_call.1} parent=1 // pred_region
      %s80 = ssub.s32 1024, 1024
      %81 = vsyncadd [#allocation12], %s80
      %s82 = sshll.u32 [#allocation11], 4
      %s83 = int_to_ptr.vmem [resolvable:$true] %s82
      %88 = dma.hbm_to_vmem [thread:$0]  %s5, 1024, %s83, [#allocation12], 64, 64, 4
    $region25: #{tpu_custom_call.1} parent=1 // pred_fallthru
      _
    // Predicated region
    $region26: #{tpu_custom_call.1} parent=1 // pred_check
      _
    $region27: #{tpu_custom_call.1} parent=1 // pred_check_branch
      %90 = sbr.rel (0) target = $region29
    $region28: #{tpu_custom_call.1} parent=1 // pred_region
      _
    $region29: #{tpu_custom_call.1} parent=1 // pred_fallthru
      _
    // Predicated region
    $region30: #{tpu_custom_call.1} parent=1 // pred_check
      _
    $region31: #{tpu_custom_call.1} parent=1 // pred_check_branch
      %92 = sbr.rel (0) target = $region33
    $region32: #{tpu_custom_call.1} parent=1 // pred_region
      %93 = dma.done [#allocation3], 128
    $region33: #{tpu_custom_call.1} parent=1 // pred_fallthru
      _
    // Predicated region
    $region34: #{tpu_custom_call.1} parent=1 // pred_check
      _
    $region35: #{tpu_custom_call.1} parent=1 // pred_check_branch
      %95 = sbr.rel (0) target = $region37
    $region36: #{tpu_custom_call.1} parent=1 // pred_region
      %96 = dma.done [#allocation6], 1024
    $region37: #{tpu_custom_call.1} parent=1 // pred_fallthru
      _
    // Predicated region
    $region38: #{tpu_custom_call.1} parent=1 // pred_check
      _
    $region39: #{tpu_custom_call.1} parent=1 // pred_check_branch
      %98 = sbr.rel (0) target = $region41
    $region40: #{tpu_custom_call.1} parent=1 // pred_region
      %99 = dma.done [#allocation6], 1024
    $region41: #{tpu_custom_call.1} parent=1 // pred_fallthru
      _
    // Predicated region
    $region42: #{tpu_custom_call.1} parent=1 // pred_check
      _
    $region43: #{tpu_custom_call.1} parent=1 // pred_check_branch
      %101 = sbr.rel (0) target = $region45
    $region44: #{tpu_custom_call.1} parent=1 // pred_region
      %102 = dma.done [#allocation9], 1024
    $region45: #{tpu_custom_call.1} parent=1 // pred_fallthru
      _
    // Predicated region
    $region46: #{tpu_custom_call.1} parent=1 // pred_check
      _
    $region47: #{tpu_custom_call.1} parent=1 // pred_check_branch
      %104 = sbr.rel (0) target = $region49
    $region48: #{tpu_custom_call.1} parent=1 // pred_region
      %105 = dma.done [#allocation9], 1024
    $region49: #{tpu_custom_call.1} parent=1 // pred_fallthru
      _
    // Predicated region
    $region50: #{tpu_custom_call.1} parent=1 // pred_check
      _
    $region51: #{tpu_custom_call.1} parent=1 // pred_check_branch
      %107 = sbr.rel (0) target = $region53
    $region52: #{tpu_custom_call.1} parent=1 // pred_region
      %108 = dma.done [#allocation12], 1024
    $region53: #{tpu_custom_call.1} parent=1 // pred_fallthru
      _
    %v110 = vld [vmem:[#allocation2] sm:$0xf]
    %v111 = vld [vmem:[#allocation2 + $0x4] sm:$0xf]
    %v112 = vld [vmem:[#allocation5] sm:$0xf]
    %v113 = vld [vmem:[#allocation5 + $0x4] sm:$0xf]
    %v114 = vld [vmem:[#allocation5 + $0x8] sm:$0xf]
    %v115 = vld [vmem:[#allocation5 + $0xc] sm:$0xf]
    %v116 = vld [vmem:[#allocation5 + $0x10] sm:$0xf]
    %v117 = vld [vmem:[#allocation5 + $0x14] sm:$0xf]
    %v118 = vld [vmem:[#allocation5 + $0x18] sm:$0xf]
    %v119 = vld [vmem:[#allocation5 + $0x1c] sm:$0xf]
    %v120 = vld [vmem:[#allocation5 + $0x20] sm:$0xf]
    %v121 = vld [vmem:[#allocation5 + $0x24] sm:$0xf]
    %v122 = vld [vmem:[#allocation5 + $0x28] sm:$0xf]
    %v123 = vld [vmem:[#allocation5 + $0x2c] sm:$0xf]
    %v124 = vld [vmem:[#allocation5 + $0x30] sm:$0xf]
    %v125 = vld [vmem:[#allocation5 + $0x34] sm:$0xf]
    %v126 = vld [vmem:[#allocation5 + $0x38] sm:$0xf]
    %v127 = vld [vmem:[#allocation5 + $0x3c] sm:$0xf]
    %v128 = vld [vmem:[%s6] sm:$0x1]
    %v129 = vlaneseq
    %v130 = vshrl.u32 %v129, 7
    %v131 = vsub.s32 0, %v130
    %v132 = vrot.slane %v128, %v131
    %v135 = vunpack.c.l.b16 %v110
    %v136 = vunpack.c.l.b16 %v111
    %v137 = vpack.c.b16 %v136, %v135
    %v155 = vunpack.c.l.b16 %v112
    %v156 = vunpack.c.l.b16 %v113
    %v157 = vunpack.c.l.b16 %v114
    %v158 = vunpack.c.l.b16 %v115
    %v159 = vunpack.c.l.b16 %v116
    %v160 = vunpack.c.l.b16 %v117
    %v161 = vunpack.c.l.b16 %v118
    %v162 = vunpack.c.l.b16 %v119
    %v163 = vunpack.c.l.b16 %v120
    %v164 = vunpack.c.l.b16 %v121
    %v165 = vunpack.c.l.b16 %v122
    %v166 = vunpack.c.l.b16 %v123
    %v167 = vunpack.c.l.b16 %v124
    %v168 = vunpack.c.l.b16 %v125
    %v169 = vunpack.c.l.b16 %v126
    %v170 = vunpack.c.l.b16 %v127
    %v171 = vpack.c.b16 %v156, %v155
    %v172 = vpack.c.b16 %v158, %v157
    %v173 = vpack.c.b16 %v160, %v159
    %v174 = vpack.c.b16 %v162, %v161
    %v175 = vpack.c.b16 %v164, %v163
    %v176 = vpack.c.b16 %v166, %v165
    %v177 = vpack.c.b16 %v168, %v167
    %v178 = vpack.c.b16 %v170, %v169
    %187 = vmatprep.subr.bf16.mxu0 0
    %188 = vmatpush1.bf16.msra.mxu0 %v171
    %189 = vmatprep.subr.bf16.mxu0 0
    %190 = vmatpush1.bf16.msra.mxu0 %v172
    %191 = vmatprep.subr.bf16.mxu0 0
    %192 = vmatpush1.bf16.msra.mxu0 %v173
    %193 = vmatprep.subr.bf16.mxu0 0
    %194 = vmatpush1.bf16.msra.mxu0 %v174
    %195 = vmatprep.subr.bf16.mxu0 0
    %196 = vmatpush1.bf16.msra.mxu0 %v175
    %197 = vmatprep.subr.bf16.mxu0 0
    %198 = vmatpush1.bf16.msra.mxu0 %v176
    %199 = vmatprep.subr.bf16.mxu0 0
    %200 = vmatpush1.bf16.msra.mxu0 %v177
    %201 = vmatprep.subr.bf16.mxu0 0
    %202 = vmatpush1.bf16.msra.mxu0 %v178
    %203 = vmatprep.subr.bf16.mxu0 0
    %204 = vmatpush1.bf16.msra.mxu0 0
    %205 = vmatprep.subr.bf16.mxu0 0
    %206 = vmatpush1.bf16.msra.mxu0 0
    %207 = vmatprep.subr.bf16.mxu0 0
    %208 = vmatpush1.bf16.msra.mxu0 0
    %209 = vmatprep.subr.bf16.mxu0 0
    %210 = vmatpush1.bf16.msra.mxu0 0
    %211 = vmatprep.subr.bf16.mxu0 0
    %212 = vmatpush1.bf16.msra.mxu0 0
    %213 = vmatprep.subr.bf16.mxu0 0
    %214 = vmatpush1.bf16.msra.mxu0 0
    %215 = vmatprep.subr.bf16.mxu0 0
    %216 = vmatpush1.bf16.msra.mxu0 0
    %217 = vmatprep.subr.bf16.mxu0 0
    %218 = vmatpush1.bf16.msra.mxu0 0
    %219 = vmatprep.mubr.bf16.mxu0 0
    %220 = vmatmul.mubr.bf16.gmra.mrb[0].mxu0 %v137
    %v221 = vpop.f32.mrb[0].mxu0
    %v222 = vadd.f32 %v132, %v221
    %v223 = vpop.f32.mrb[0].mxu0
    %v224 = vpop.f32.mrb[0].mxu0
    %v225 = vadd.f32 %v132, %v224
    %v226 = vpop.f32.mrb[0].mxu0
    %227 = vdwg.mxu0
    %v228 = vmax.f32 %v222, 0.0
    %v229 = vmax.f32 %v225, 0.0
    %v230 = vpack.c.bf16 %v229, %v228
    %v231 = vld [vmem:[#allocation7] sm:$0xf]
    %v232 = vld [vmem:[#allocation7 + $0x4] sm:$0xf]
    %v233 = vld [vmem:[#allocation7 + $0x8] sm:$0xf]
    %v234 = vld [vmem:[#allocation7 + $0xc] sm:$0xf]
    %v235 = vld [vmem:[#allocation7 + $0x10] sm:$0xf]
    %v236 = vld [vmem:[#allocation7 + $0x14] sm:$0xf]
    %v237 = vld [vmem:[#allocation7 + $0x18] sm:$0xf]
    %v238 = vld [vmem:[#allocation7 + $0x1c] sm:$0xf]
    %v239 = vld [vmem:[#allocation7 + $0x20] sm:$0xf]
    %v240 = vld [vmem:[#allocation7 + $0x24] sm:$0xf]
    %v241 = vld [vmem:[#allocation7 + $0x28] sm:$0xf]
    %v242 = vld [vmem:[#allocation7 + $0x2c] sm:$0xf]
    %v243 = vld [vmem:[#allocation7 + $0x30] sm:$0xf]
    %v244 = vld [vmem:[#allocation7 + $0x34] sm:$0xf]
    %v245 = vld [vmem:[#allocation7 + $0x38] sm:$0xf]
    %v246 = vld [vmem:[#allocation7 + $0x3c] sm:$0xf]
    %v247 = vld [vmem:[%s6 + $0x1] sm:$0x1]
    %v248 = vlaneseq
    %v249 = vshrl.u32 %v248, 7
    %v250 = vsub.s32 0, %v249
    %v251 = vrot.slane %v247, %v250
    %v268 = vunpack.c.l.b16 %v231
    %v269 = vunpack.c.l.b16 %v232
    %v270 = vunpack.c.l.b16 %v233
    %v271 = vunpack.c.l.b16 %v234
    %v272 = vunpack.c.l.b16 %v235
    %v273 = vunpack.c.l.b16 %v236
    %v274 = vunpack.c.l.b16 %v237
    %v275 = vunpack.c.l.b16 %v238
    %v276 = vunpack.c.l.b16 %v239
    %v277 = vunpack.c.l.b16 %v240
    %v278 = vunpack.c.l.b16 %v241
    %v279 = vunpack.c.l.b16 %v242
    %v280 = vunpack.c.l.b16 %v243
    %v281 = vunpack.c.l.b16 %v244
    %v282 = vunpack.c.l.b16 %v245
    %v283 = vunpack.c.l.b16 %v246
    %v284 = vpack.c.b16 %v269, %v268
    %v285 = vpack.c.b16 %v271, %v270
    %v286 = vpack.c.b16 %v273, %v272
    %v287 = vpack.c.b16 %v275, %v274
    %v288 = vpack.c.b16 %v277, %v276
    %v289 = vpack.c.b16 %v279, %v278
    %v290 = vpack.c.b16 %v281, %v280
    %v291 = vpack.c.b16 %v283, %v282
    %300 = vmatprep.subr.bf16.mxu0 0
    %301 = vmatpush1.bf16.msra.mxu0 %v284
    %302 = vmatprep.subr.bf16.mxu0 0
    %303 = vmatpush1.bf16.msra.mxu0 %v285
    %304 = vmatprep.subr.bf16.mxu0 0
    %305 = vmatpush1.bf16.msra.mxu0 %v286
    %306 = vmatprep.subr.bf16.mxu0 0
    %307 = vmatpush1.bf16.msra.mxu0 %v287
    %308 = vmatprep.subr.bf16.mxu0 0
    %309 = vmatpush1.bf16.msra.mxu0 %v288
    %310 = vmatprep.subr.bf16.mxu0 0
    %311 = vmatpush1.bf16.msra.mxu0 %v289
    %312 = vmatprep.subr.bf16.mxu0 0
    %313 = vmatpush1.bf16.msra.mxu0 %v290
    %314 = vmatprep.subr.bf16.mxu0 0
    %315 = vmatpush1.bf16.msra.mxu0 %v291
    %316 = vmatprep.subr.bf16.mxu0 0
    %317 = vmatpush1.bf16.msra.mxu0 0
    %318 = vmatprep.subr.bf16.mxu0 0
    %319 = vmatpush1.bf16.msra.mxu0 0
    %320 = vmatprep.subr.bf16.mxu0 0
    %321 = vmatpush1.bf16.msra.mxu0 0
    %322 = vmatprep.subr.bf16.mxu0 0
    %323 = vmatpush1.bf16.msra.mxu0 0
    %324 = vmatprep.subr.bf16.mxu0 0
    %325 = vmatpush1.bf16.msra.mxu0 0
    %326 = vmatprep.subr.bf16.mxu0 0
    %327 = vmatpush1.bf16.msra.mxu0 0
    %328 = vmatprep.subr.bf16.mxu0 0
    %329 = vmatpush1.bf16.msra.mxu0 0
    %330 = vmatprep.subr.bf16.mxu0 0
    %331 = vmatpush1.bf16.msra.mxu0 0
    %332 = vmatprep.mubr.bf16.mxu0 0
    %333 = vmatmul.mubr.bf16.gmra.mrb[0].mxu0 %v230
    %v334 = vpop.f32.mrb[0].mxu0
    %v335 = vadd.f32 %v251, %v334
    %v336 = vpop.f32.mrb[0].mxu0
    %v337 = vpop.f32.mrb[0].mxu0
    %v338 = vadd.f32 %v251, %v337
    %v339 = vpop.f32.mrb[0].mxu0
    %340 = vdwg.mxu0
    %v341 = vmax.f32 %v335, 0.0
    %v342 = vmax.f32 %v338, 0.0
    %v343 = vpack.c.bf16 %v342, %v341
    %v344 = vld [vmem:[#allocation8] sm:$0xf]
    %v345 = vld [vmem:[#allocation8 + $0x4] sm:$0xf]
    %v346 = vld [vmem:[#allocation8 + $0x8] sm:$0xf]
    %v347 = vld [vmem:[#allocation8 + $0xc] sm:$0xf]
    %v348 = vld [vmem:[#allocation8 + $0x10] sm:$0xf]
    %v349 = vld [vmem:[#allocation8 + $0x14] sm:$0xf]
    %v350 = vld [vmem:[#allocation8 + $0x18] sm:$0xf]
    %v351 = vld [vmem:[#allocation8 + $0x1c] sm:$0xf]
    %v352 = vld [vmem:[#allocation8 + $0x20] sm:$0xf]
    %v353 = vld [vmem:[#allocation8 + $0x24] sm:$0xf]
    %v354 = vld [vmem:[#allocation8 + $0x28] sm:$0xf]
    %v355 = vld [vmem:[#allocation8 + $0x2c] sm:$0xf]
    %v356 = vld [vmem:[#allocation8 + $0x30] sm:$0xf]
    %v357 = vld [vmem:[#allocation8 + $0x34] sm:$0xf]
    %v358 = vld [vmem:[#allocation8 + $0x38] sm:$0xf]
    %v359 = vld [vmem:[#allocation8 + $0x3c] sm:$0xf]
    %v360 = vld [vmem:[%s6 + $0x2] sm:$0x1]
    %v361 = vlaneseq
    %v362 = vshrl.u32 %v361, 7
    %v363 = vsub.s32 0, %v362
    %v364 = vrot.slane %v360, %v363
    %v381 = vunpack.c.l.b16 %v344
    %v382 = vunpack.c.l.b16 %v345
    %v383 = vunpack.c.l.b16 %v346
    %v384 = vunpack.c.l.b16 %v347
    %v385 = vunpack.c.l.b16 %v348
    %v386 = vunpack.c.l.b16 %v349
    %v387 = vunpack.c.l.b16 %v350
    %v388 = vunpack.c.l.b16 %v351
    %v389 = vunpack.c.l.b16 %v352
    %v390 = vunpack.c.l.b16 %v353
    %v391 = vunpack.c.l.b16 %v354
    %v392 = vunpack.c.l.b16 %v355
    %v393 = vunpack.c.l.b16 %v356
    %v394 = vunpack.c.l.b16 %v357
    %v395 = vunpack.c.l.b16 %v358
    %v396 = vunpack.c.l.b16 %v359
    %v397 = vpack.c.b16 %v382, %v381
    %v398 = vpack.c.b16 %v384, %v383
    %v399 = vpack.c.b16 %v386, %v385
    %v400 = vpack.c.b16 %v388, %v387
    %v401 = vpack.c.b16 %v390, %v389
    %v402 = vpack.c.b16 %v392, %v391
    %v403 = vpack.c.b16 %v394, %v393
    %v404 = vpack.c.b16 %v396, %v395
    %413 = vmatprep.subr.bf16.mxu0 0
    %414 = vmatpush1.bf16.msra.mxu0 %v397
    %415 = vmatprep.subr.bf16.mxu0 0
    %416 = vmatpush1.bf16.msra.mxu0 %v398
    %417 = vmatprep.subr.bf16.mxu0 0
    %418 = vmatpush1.bf16.msra.mxu0 %v399
    %419 = vmatprep.subr.bf16.mxu0 0
    %420 = vmatpush1.bf16.msra.mxu0 %v400
    %421 = vmatprep.subr.bf16.mxu0 0
    %422 = vmatpush1.bf16.msra.mxu0 %v401
    %423 = vmatprep.subr.bf16.mxu0 0
    %424 = vmatpush1.bf16.msra.mxu0 %v402
    %425 = vmatprep.subr.bf16.mxu0 0
    %426 = vmatpush1.bf16.msra.mxu0 %v403
    %427 = vmatprep.subr.bf16.mxu0 0
    %428 = vmatpush1.bf16.msra.mxu0 %v404
    %429 = vmatprep.subr.bf16.mxu0 0
    %430 = vmatpush1.bf16.msra.mxu0 0
    %431 = vmatprep.subr.bf16.mxu0 0
    %432 = vmatpush1.bf16.msra.mxu0 0
    %433 = vmatprep.subr.bf16.mxu0 0
    %434 = vmatpush1.bf16.msra.mxu0 0
    %435 = vmatprep.subr.bf16.mxu0 0
    %436 = vmatpush1.bf16.msra.mxu0 0
    %437 = vmatprep.subr.bf16.mxu0 0
    %438 = vmatpush1.bf16.msra.mxu0 0
    %439 = vmatprep.subr.bf16.mxu0 0
    %440 = vmatpush1.bf16.msra.mxu0 0
    %441 = vmatprep.subr.bf16.mxu0 0
    %442 = vmatpush1.bf16.msra.mxu0 0
    %443 = vmatprep.subr.bf16.mxu0 0
    %444 = vmatpush1.bf16.msra.mxu0 0
    %445 = vmatprep.mubr.bf16.mxu0 0
    %446 = vmatmul.mubr.bf16.gmra.mrb[0].mxu0 %v343
    %v447 = vpop.f32.mrb[0].mxu0
    %v448 = vadd.f32 %v364, %v447
    %v449 = vpop.f32.mrb[0].mxu0
    %v450 = vpop.f32.mrb[0].mxu0
    %v451 = vadd.f32 %v364, %v450
    %v452 = vpop.f32.mrb[0].mxu0
    %453 = vdwg.mxu0
    %v454 = vmax.f32 %v448, 0.0
    %v455 = vmax.f32 %v451, 0.0
    %v456 = vpack.c.bf16 %v455, %v454
    %v457 = vld [vmem:[#allocation10] sm:$0xf]
    %v458 = vld [vmem:[#allocation10 + $0x4] sm:$0xf]
    %v459 = vld [vmem:[#allocation10 + $0x8] sm:$0xf]
    %v460 = vld [vmem:[#allocation10 + $0xc] sm:$0xf]
    %v461 = vld [vmem:[#allocation10 + $0x10] sm:$0xf]
    %v462 = vld [vmem:[#allocation10 + $0x14] sm:$0xf]
    %v463 = vld [vmem:[#allocation10 + $0x18] sm:$0xf]
    %v464 = vld [vmem:[#allocation10 + $0x1c] sm:$0xf]
    %v465 = vld [vmem:[#allocation10 + $0x20] sm:$0xf]
    %v466 = vld [vmem:[#allocation10 + $0x24] sm:$0xf]
    %v467 = vld [vmem:[#allocation10 + $0x28] sm:$0xf]
    %v468 = vld [vmem:[#allocation10 + $0x2c] sm:$0xf]
    %v469 = vld [vmem:[#allocation10 + $0x30] sm:$0xf]
    %v470 = vld [vmem:[#allocation10 + $0x34] sm:$0xf]
    %v471 = vld [vmem:[#allocation10 + $0x38] sm:$0xf]
    %v472 = vld [vmem:[#allocation10 + $0x3c] sm:$0xf]
    %v473 = vld [vmem:[%s6 + $0x3] sm:$0x1]
    %v474 = vlaneseq
    %v475 = vshrl.u32 %v474, 7
    %v476 = vsub.s32 0, %v475
    %v477 = vrot.slane %v473, %v476
    %v494 = vunpack.c.l.b16 %v457
    %v495 = vunpack.c.l.b16 %v458
    %v496 = vunpack.c.l.b16 %v459
    %v497 = vunpack.c.l.b16 %v460
    %v498 = vunpack.c.l.b16 %v461
    %v499 = vunpack.c.l.b16 %v462
    %v500 = vunpack.c.l.b16 %v463
    %v501 = vunpack.c.l.b16 %v464
    %v502 = vunpack.c.l.b16 %v465
    %v503 = vunpack.c.l.b16 %v466
    %v504 = vunpack.c.l.b16 %v467
    %v505 = vunpack.c.l.b16 %v468
    %v506 = vunpack.c.l.b16 %v469
    %v507 = vunpack.c.l.b16 %v470
    %v508 = vunpack.c.l.b16 %v471
    %v509 = vunpack.c.l.b16 %v472
    %v510 = vpack.c.b16 %v495, %v494
    %v511 = vpack.c.b16 %v497, %v496
    %v512 = vpack.c.b16 %v499, %v498
    %v513 = vpack.c.b16 %v501, %v500
    %v514 = vpack.c.b16 %v503, %v502
    %v515 = vpack.c.b16 %v505, %v504
    %v516 = vpack.c.b16 %v507, %v506
    %v517 = vpack.c.b16 %v509, %v508
    %526 = vmatprep.subr.bf16.mxu0 0
    %527 = vmatpush1.bf16.msra.mxu0 %v510
    %528 = vmatprep.subr.bf16.mxu0 0
    %529 = vmatpush1.bf16.msra.mxu0 %v511
    %530 = vmatprep.subr.bf16.mxu0 0
    %531 = vmatpush1.bf16.msra.mxu0 %v512
    %532 = vmatprep.subr.bf16.mxu0 0
    %533 = vmatpush1.bf16.msra.mxu0 %v513
    %534 = vmatprep.subr.bf16.mxu0 0
    %535 = vmatpush1.bf16.msra.mxu0 %v514
    %536 = vmatprep.subr.bf16.mxu0 0
    %537 = vmatpush1.bf16.msra.mxu0 %v515
    %538 = vmatprep.subr.bf16.mxu0 0
    %539 = vmatpush1.bf16.msra.mxu0 %v516
    %540 = vmatprep.subr.bf16.mxu0 0
    %541 = vmatpush1.bf16.msra.mxu0 %v517
    %542 = vmatprep.subr.bf16.mxu0 0
    %543 = vmatpush1.bf16.msra.mxu0 0
    %544 = vmatprep.subr.bf16.mxu0 0
    %545 = vmatpush1.bf16.msra.mxu0 0
    %546 = vmatprep.subr.bf16.mxu0 0
    %547 = vmatpush1.bf16.msra.mxu0 0
    %548 = vmatprep.subr.bf16.mxu0 0
    %549 = vmatpush1.bf16.msra.mxu0 0
    %550 = vmatprep.subr.bf16.mxu0 0
    %551 = vmatpush1.bf16.msra.mxu0 0
    %552 = vmatprep.subr.bf16.mxu0 0
    %553 = vmatpush1.bf16.msra.mxu0 0
    %554 = vmatprep.subr.bf16.mxu0 0
    %555 = vmatpush1.bf16.msra.mxu0 0
    %556 = vmatprep.subr.bf16.mxu0 0
    %557 = vmatpush1.bf16.msra.mxu0 0
    %558 = vmatprep.mubr.bf16.mxu0 0
    %559 = vmatmul.mubr.bf16.gmra.mrb[0].mxu0 %v456
    %v560 = vpop.f32.mrb[0].mxu0
    %v561 = vadd.f32 %v477, %v560
    %v562 = vpop.f32.mrb[0].mxu0
    %v563 = vpop.f32.mrb[0].mxu0
    %v564 = vadd.f32 %v477, %v563
    %v565 = vpop.f32.mrb[0].mxu0
    %566 = vdwg.mxu0
    %v567 = vmax.f32 %v561, 0.0
    %v568 = vmax.f32 %v564, 0.0
    %v569 = vpack.c.bf16 %v568, %v567
    %v570 = vld [vmem:[#allocation11] sm:$0xf]
    %v571 = vld [vmem:[#allocation11 + $0x4] sm:$0xf]
    %v572 = vld [vmem:[#allocation11 + $0x8] sm:$0xf]
    %v573 = vld [vmem:[#allocation11 + $0xc] sm:$0xf]
    %v574 = vld [vmem:[#allocation11 + $0x10] sm:$0xf]
    %v575 = vld [vmem:[#allocation11 + $0x14] sm:$0xf]
    %v576 = vld [vmem:[#allocation11 + $0x18] sm:$0xf]
    %v577 = vld [vmem:[#allocation11 + $0x1c] sm:$0xf]
    %v578 = vld [vmem:[#allocation11 + $0x20] sm:$0xf]
    %v579 = vld [vmem:[#allocation11 + $0x24] sm:$0xf]
    %v580 = vld [vmem:[#allocation11 + $0x28] sm:$0xf]
    %v581 = vld [vmem:[#allocation11 + $0x2c] sm:$0xf]
    %v582 = vld [vmem:[#allocation11 + $0x30] sm:$0xf]
    %v583 = vld [vmem:[#allocation11 + $0x34] sm:$0xf]
    %v584 = vld [vmem:[#allocation11 + $0x38] sm:$0xf]
    %v585 = vld [vmem:[#allocation11 + $0x3c] sm:$0xf]
    %v586 = vld [vmem:[%s6 + $0x4] sm:$0x1]
    %v587 = vlaneseq
    %v588 = vshrl.u32 %v587, 7
    %v589 = vsub.s32 0, %v588
    %v590 = vrot.slane %v586, %v589
    %v607 = vunpack.c.l.b16 %v570
    %v608 = vunpack.c.l.b16 %v571
    %v609 = vunpack.c.l.b16 %v572
    %v610 = vunpack.c.l.b16 %v573
    %v611 = vunpack.c.l.b16 %v574
    %v612 = vunpack.c.l.b16 %v575
    %v613 = vunpack.c.l.b16 %v576
    %v614 = vunpack.c.l.b16 %v577
    %v615 = vunpack.c.l.b16 %v578
    %v616 = vunpack.c.l.b16 %v579
    %v617 = vunpack.c.l.b16 %v580
    %v618 = vunpack.c.l.b16 %v581
    %v619 = vunpack.c.l.b16 %v582
    %v620 = vunpack.c.l.b16 %v583
    %v621 = vunpack.c.l.b16 %v584
    %v622 = vunpack.c.l.b16 %v585
    %v623 = vpack.c.b16 %v608, %v607
    %v624 = vpack.c.b16 %v610, %v609
    %v625 = vpack.c.b16 %v612, %v611
    %v626 = vpack.c.b16 %v614, %v613
    %v627 = vpack.c.b16 %v616, %v615
    %v628 = vpack.c.b16 %v618, %v617
    %v629 = vpack.c.b16 %v620, %v619
    %v630 = vpack.c.b16 %v622, %v621
    %639 = vmatprep.subr.bf16.mxu0 0
    %640 = vmatpush1.bf16.msra.mxu0 %v623
    %641 = vmatprep.subr.bf16.mxu0 0
    %642 = vmatpush1.bf16.msra.mxu0 %v624
    %643 = vmatprep.subr.bf16.mxu0 0
    %644 = vmatpush1.bf16.msra.mxu0 %v625
    %645 = vmatprep.subr.bf16.mxu0 0
    %646 = vmatpush1.bf16.msra.mxu0 %v626
    %647 = vmatprep.subr.bf16.mxu0 0
    %648 = vmatpush1.bf16.msra.mxu0 %v627
    %649 = vmatprep.subr.bf16.mxu0 0
    %650 = vmatpush1.bf16.msra.mxu0 %v628
    %651 = vmatprep.subr.bf16.mxu0 0
    %652 = vmatpush1.bf16.msra.mxu0 %v629
    %653 = vmatprep.subr.bf16.mxu0 0
    %654 = vmatpush1.bf16.msra.mxu0 %v630
    %655 = vmatprep.subr.bf16.mxu0 0
    %656 = vmatpush1.bf16.msra.mxu0 0
    %657 = vmatprep.subr.bf16.mxu0 0
    %658 = vmatpush1.bf16.msra.mxu0 0
    %659 = vmatprep.subr.bf16.mxu0 0
    %660 = vmatpush1.bf16.msra.mxu0 0
    %661 = vmatprep.subr.bf16.mxu0 0
    %662 = vmatpush1.bf16.msra.mxu0 0
    %663 = vmatprep.subr.bf16.mxu0 0
    %664 = vmatpush1.bf16.msra.mxu0 0
    %665 = vmatprep.subr.bf16.mxu0 0
    %666 = vmatpush1.bf16.msra.mxu0 0
    %667 = vmatprep.subr.bf16.mxu0 0
    %668 = vmatpush1.bf16.msra.mxu0 0
    %669 = vmatprep.subr.bf16.mxu0 0
    %670 = vmatpush1.bf16.msra.mxu0 0
    %671 = vmatprep.mubr.bf16.mxu0 0
    %672 = vmatmul.mubr.bf16.gmra.mrb[0].mxu0 %v569
    %v673 = vpop.f32.mrb[0].mxu0
    %v674 = vadd.f32 %v590, %v673
    %v675 = vpop.f32.mrb[0].mxu0
    %v676 = vpop.f32.mrb[0].mxu0
    %v677 = vadd.f32 %v590, %v676
    %v678 = vpop.f32.mrb[0].mxu0
    %679 = vdwg.mxu0
    %680 = vst [vmem:[#allocation13] sm:$0xff] %v674
    %681 = vst [vmem:[#allocation13 + $0x8] sm:$0xff] %v677
    // Predicated region
    $region54: #{tpu_custom_call.1} parent=1 // pred_check
      _
    $region55: #{tpu_custom_call.1} parent=1 // pred_check_branch
      %683 = sbr.rel (0) target = $region57
    $region56: #{tpu_custom_call.1} parent=1 // pred_region
      %s685 = ssub.s32 256, 256
      %686 = vsyncadd [#allocation4], %s685
      %s687 = sshll.u32 [#allocation13], 4
      %s688 = int_to_ptr.vmem [resolvable:$true] %s687
      %693 = dma.vmem_to_hbm [thread:$0]  %s688, 256, %s7, [#allocation4], 128, 128, 8
    $region57: #{tpu_custom_call.1} parent=1 // pred_fallthru
      _
    // Predicated region
    $region58: #{tpu_custom_call.1} parent=1 // pred_check
      _
    $region59: #{tpu_custom_call.1} parent=1 // pred_check_branch
      %695 = sbr.rel (0) target = $region61
    $region60: #{tpu_custom_call.1} parent=1 // pred_region
      %696 = dma.done [#allocation4], 256
    $region61: #{tpu_custom_call.1} parent=1 // pred_fallthru
      _
    %697 = vsyncpa [#allocation3], 1
    %698 = vsyncpa [#allocation6], 1
    %699 = vsyncpa [#allocation9], 1
    %700 = vsyncpa [#allocation12], 1
    %701 = vsyncpa [#allocation4], 1

</llo_original>
